<compile_context>
chip_gen: v7x
topology: tpu7x:2x2x1
jax: 0.10.0
libtpu: 0.0.40
codegen_flags: <defaults>
</compile_context>

<pallas_src>
import jax
import jax.numpy as jnp
from jax.experimental import pallas as pl
from jax.experimental.pallas import tpu as pltpu


def _ipd_kernel_resident(a_ref, zt_ref, o_ref):
    """One (tm, tn) output tile; z.T fully resident in VMEM.

    a_ref : (tm, D)    row block i of z
    zt_ref: (D, Npad)  whole z.T, DMA'd into VMEM once (constant block index)
    o_ref : (tm, tn)   output tile
    """
    tn = o_ref.shape[1]
    col0 = pl.multiple_of(pl.program_id(1) * tn, tn)
    b = zt_ref[:, pl.ds(col0, tn)]
    o_ref[...] = jax.nn.sigmoid(
        jnp.dot(a_ref[...], b, preferred_element_type=jnp.float32)
    ).astype(o_ref.dtype)


def _ipd_kernel_tiled(a_ref, bt_ref, o_ref):
    """One (tm, tn) output tile; z.T streamed per column block.

    a_ref : (tm, D), bt_ref: (D, tn), o_ref: (tm, tn)
    """
    o_ref[...] = jax.nn.sigmoid(
        jnp.dot(a_ref[...], bt_ref[...], preferred_element_type=jnp.float32)
    ).astype(o_ref.dtype)


def _round_up(x, m):
    return ((x + m - 1) // m) * m


def inner_product_decoder(z, *, tm=256, tn=1024, out_dtype=jnp.float32,
                          resident_limit_bytes=8 << 20):
    """adj = activation(z @ z.T) with activation = sigmoid.

    z: [N, D] float -> adj: [N, N] (out_dtype, default float32).
    """
    z = jnp.asarray(z, jnp.float32)
    N, D = z.shape

    # Lane-aligned tiles, capped to the (128-padded) problem size.
    n128 = _round_up(N, 128)
    tm = min(tm, n128)
    tn = min(tn, n128)

    # Pad output rows / cols independently so the grid divides exactly.
    mp = _round_up(N, tm)           # padded output rows
    np_ = _round_up(N, tn)          # padded output cols

    z_lhs = z if mp == N else jnp.pad(z, ((0, mp - N), (0, 0)))
    z_rhs = z if np_ == N else jnp.pad(z, ((0, np_ - N), (0, 0)))
    zt = z_rhs.T                    # (D, np_): native [K, N] layout for the MXU

    grid = (mp // tm, np_ // tn)

    resident = D * np_ * 4 <= resident_limit_bytes
    if resident:
        kernel = _ipd_kernel_resident
        b_spec = pl.BlockSpec((D, np_), lambda i, j: (0, 0))   # whole z.T, DMA once
        b_bytes = 2 * D * np_ * 4
    else:
        kernel = _ipd_kernel_tiled
        b_spec = pl.BlockSpec((D, tn), lambda i, j: (0, j))
        b_bytes = 2 * D * tn * 4

    # VMEM budget: double-buffered A, B and output, with headroom.
    est = 2 * tm * D * 4 + b_bytes + 2 * tm * tn * 4
    vmem_limit = min(max(2 * est, 32 << 20), 48 << 20)   # stays inside v7x's 64 MiB

    out = pl.pallas_call(
        kernel,
        out_shape=jax.ShapeDtypeStruct((mp, np_), out_dtype),
        grid_spec=pltpu.PrefetchScalarGridSpec(
            num_scalar_prefetch=0,
            grid=grid,
            in_specs=[
                pl.BlockSpec((tm, D), lambda i, j: (i, 0)),    # z row block i
                b_spec,                                        # z.T (resident or tiled)
            ],
            out_specs=pl.BlockSpec((tm, tn), lambda i, j: (i, j)),
        ),
        compiler_params=pltpu.CompilerParams(
            dimension_semantics=("parallel", "parallel"),
            vmem_limit_bytes=vmem_limit,
        ),
    )(z_lhs, zt)

    if (mp, np_) != (N, N):
        out = out[:N, :N]
    return out


if __name__ == "__main__":
    key = jax.random.PRNGKey(0)
    N, D = 256, 128  # small, decoder-typical shapes
    z = jax.random.normal(key, (N, D), dtype=jnp.float32)

    adj = inner_product_decoder(z)
    adj = jax.block_until_ready(adj)

    # correctness check against plain-JAX reference
    ref = jax.nn.sigmoid(z @ z.T)
    assert adj.shape == (N, N)
    assert jnp.allclose(adj, ref, atol=1e-5, rtol=1e-5)

    print("KERNEL_OK")
</pallas_src>

<mosaic_0001>
module attributes {stable_mosaic.version = 11 : i64} {
  func.func @_ipd_kernel_resident(%arg0: i32, %arg1: i32, %arg2: memref<256x128xf32, #tpu.memory_space<vmem>>, %arg3: memref<128x256xf32, #tpu.memory_space<vmem>>, %arg4: memref<256x256xf32, #tpu.memory_space<vmem>>) attributes {dimension_semantics = [#tpu.dimension_semantics<parallel>, #tpu.dimension_semantics<parallel>], iteration_bounds = array<i64: 1, 1>, scalar_prefetch = 0 : i64, scratch_operands = 0 : i64, tpu.core_type = #tpu.core_type<tc>, window_params = [{transform_indices = @transform_0, window_bounds = array<i64: 256, 128>}, {pipeline_mode = #tpu.pipeline_mode<synchronous>, transform_indices = @transform_1, window_bounds = array<i64: 128, 256>}, {transform_indices = @transform_2, window_bounds = array<i64: 256, 256>}]} {
    %c256_i32 = arith.constant 256 : i32
    %0 = arith.muli %arg1, %c256_i32 : i32
    %1 = tpu.assume_multiple %0, 256 : i32
    %c0 = arith.constant 0 : index
    %2 = arith.index_cast %1 : i32 to index
    %3 = vector.load %arg3[%c0, %2] : memref<128x256xf32, #tpu.memory_space<vmem>>, vector<128x256xf32>
    %c0_0 = arith.constant 0 : index
    %c0_1 = arith.constant 0 : index
    %4 = vector.load %arg2[%c0_0, %c0_1] : memref<256x128xf32, #tpu.memory_space<vmem>>, vector<256x128xf32>
    %cst = arith.constant dense<0.000000e+00> : vector<256x256xf32>
    %5 = tpu.matmul %4, %3, %cst {dimension_numbers = #tpu.dot_dimension_numbers<[1], [0], [0], [1], [0, 0, 1, 1], [], []>} : vector<256x128xf32>, vector<128x256xf32>, vector<256x256xf32> -> vector<256x256xf32>
    %6 = arith.negf %5 : vector<256x256xf32>
    %7 = math.exp %6 : vector<256x256xf32>
    %cst_2 = arith.constant 1.000000e+00 : f32
    %8 = vector.broadcast %cst_2 : f32 to vector<256x256xf32>
    %9 = arith.addf %8, %7 : vector<256x256xf32>
    %10 = arith.divf %8, %9 : vector<256x256xf32>
    %c0_3 = arith.constant 0 : index
    %c0_4 = arith.constant 0 : index
    %11 = vector.load %arg4[%c0_3, %c0_4] : memref<256x256xf32, #tpu.memory_space<vmem>>, vector<256x256xf32>
    tpu.vector_store %arg4[%c0_3, %c0_4], %10 {strides = array<i32>} : memref<256x256xf32, #tpu.memory_space<vmem>>, vector<256x256xf32>,
    return
  }
  func.func @transform_0(%arg0: i32, %arg1: i32) -> (i32, i32) {
    %c0_i32 = arith.constant 0 : i32
    %c0_i32_0 = arith.constant 0 : i32
    return %arg0, %c0_i32 : i32, i32
  }
  func.func @transform_1(%arg0: i32, %arg1: i32) -> (i32, i32) {
    %c0_i32 = arith.constant 0 : i32
    %c0_i32_0 = arith.constant 0 : i32
    %c0_i32_1 = arith.constant 0 : i32
    return %c0_i32, %c0_i32_0 : i32, i32
  }
  func.func @transform_2(%arg0: i32, %arg1: i32) -> (i32, i32) {
    %c0_i32 = arith.constant 0 : i32
    return %arg0, %arg1 : i32, i32
  }
}

</mosaic_0001>

<llo_original>
// kernel: tpu_custom_call.1
$region0: #{tpu_custom_call.1}
  #allocation0 [shape = 'u32[]', space=smem, size = 0x4, offset = 0x4, fixed_abs, tag = 'smem constant byte address 0x4 - core index']
  #allocation1 [shape = 'u32[144,128]{1,0:T(1,128)}', space=vmem, size = 0x12000, scoped, tag = 'internal scratch']
  %s0 = inlined_call_operand.hbm [shape: f32[256,128], index: 0, kind: input, shape index: {}]
  %s1 = inlined_call_operand.hbm [shape: f32[128,256], index: 1, kind: input, shape index: {}]
  %s2 = inlined_call_operand.hbm [shape: f32[256,256], index: 2, kind: output, shape index: {}]
  %s3 = sld [smem:[#allocation0]]
  $region26: #{tpu_custom_call.1} parent=0
    _
  %s5 = ssub.s32 1, %s3
  %s6 = scalar_select 0, %s5, %s3
  $region1: #{tpu_custom_call.1} parent=0
    #allocation2 [shape = 'u8[131072]{0}', space=vmem, size = 0x20000, scoped, tag = 'input window, operand 0, single buffered']
    #allocation3 [shape = 's32[1]{0}', space=sflag, size = 0x4, scoped, tag = 'scoped memory for tpu_custom_call.1']
    #allocation4 [shape = 's32[1]{0}', space=sflag, size = 0x4, scoped, tag = 'scoped memory for tpu_custom_call.1']
    #allocation5 [shape = 'u8[131072]{0}', space=vmem, size = 0x20000, scoped, tag = 'input window, operand 1, single buffered']
    #allocation6 [shape = 's32[1]{0}', space=sflag, size = 0x4, scoped, tag = 'scoped memory for tpu_custom_call.1']
    #allocation7 [shape = 'u8[262144]{0}', space=vmem, size = 0x40000, scoped, tag = 'output window, operand 0, single buffered']
    %7 = vsyncpa [#allocation3], 0
    %8 = vsyncpa [#allocation6], 0
    %9 = vsyncpa [#allocation4], 0
    // Predicated region
    $region2: #{tpu_custom_call.1} parent=1 // pred_check
      _
    $region3: #{tpu_custom_call.1} parent=1 // pred_check_branch
      %11 = sbr.rel (0) target = $region5
    $region4: #{tpu_custom_call.1} parent=1 // pred_region
      %s13 = ssub.s32 4096, 4096
      %14 = vsyncadd [#allocation3], %s13
      %s15 = sshll.u32 [#allocation2], 4
      %s16 = int_to_ptr.vmem [resolvable:$true] %s15
      %21 = dma.hbm_to_vmem [thread:$0]  %s0, 4096, %s16, [#allocation3], 128, 128, 8
    $region5: #{tpu_custom_call.1} parent=1 // pred_fallthru
      _
    // Predicated region
    $region6: #{tpu_custom_call.1} parent=1 // pred_check
      _
    $region7: #{tpu_custom_call.1} parent=1 // pred_check_branch
      %23 = sbr.rel (0) target = $region9
    $region8: #{tpu_custom_call.1} parent=1 // pred_region
      %s25 = ssub.s32 4096, 4096
      %26 = vsyncadd [#allocation6], %s25
      %s27 = sshll.u32 [#allocation5], 4
      %s28 = int_to_ptr.vmem [resolvable:$true] %s27
      %33 = dma.hbm_to_vmem [thread:$0]  %s1, 4096, %s28, [#allocation6], 256, 256, 16
    $region9: #{tpu_custom_call.1} parent=1 // pred_fallthru
      _
    // Predicated region
    $region10: #{tpu_custom_call.1} parent=1 // pred_check
      _
    $region11: #{tpu_custom_call.1} parent=1 // pred_check_branch
      %35 = sbr.rel (0) target = $region13
    $region12: #{tpu_custom_call.1} parent=1 // pred_region
      %36 = dma.done [#allocation3], 4096
    $region13: #{tpu_custom_call.1} parent=1 // pred_fallthru
      _
    // Predicated region
    $region14: #{tpu_custom_call.1} parent=1 // pred_check
      _
    $region15: #{tpu_custom_call.1} parent=1 // pred_check_branch
      %38 = sbr.rel (0) target = $region17
    $region16: #{tpu_custom_call.1} parent=1 // pred_region
      %39 = dma.done [#allocation6], 4096
    $region17: #{tpu_custom_call.1} parent=1 // pred_fallthru
      _
    %s40 = smul.u32 0, 256
    %s41 = sshra.s32 %s40, 7
    %s42 = sand.u32 %s40, 127
    %s43 = smul.addr %s41, 8
    %s44 = scalar_lea.vmem [#allocation5], %s43
    %v45 = vld [vmem:[%s44] sm:$0xff]
    %v46 = vld [vmem:[%s44 + $0x8] sm:$0xff]
    %v47 = vld [vmem:[%s44 + $0x10] sm:$0xff]
    %v48 = vld [vmem:[%s44 + $0x18] sm:$0xff]
    %v49 = vld [vmem:[%s44 + $0x20] sm:$0xff]
    %v50 = vld [vmem:[%s44 + $0x28] sm:$0xff]
    %v51 = vld [vmem:[%s44 + $0x30] sm:$0xff]
    %v52 = vld [vmem:[%s44 + $0x38] sm:$0xff]
    %v53 = vld [vmem:[%s44 + $0x40] sm:$0xff]
    %v54 = vld [vmem:[%s44 + $0x48] sm:$0xff]
    %v55 = vld [vmem:[%s44 + $0x50] sm:$0xff]
    %v56 = vld [vmem:[%s44 + $0x58] sm:$0xff]
    %v57 = vld [vmem:[%s44 + $0x60] sm:$0xff]
    %v58 = vld [vmem:[%s44 + $0x68] sm:$0xff]
    %v59 = vld [vmem:[%s44 + $0x70] sm:$0xff]
    %v60 = vld [vmem:[%s44 + $0x78] sm:$0xff]
    %v61 = vld [vmem:[%s44 + $0x80] sm:$0xff]
    %v62 = vld [vmem:[%s44 + $0x88] sm:$0xff]
    %v63 = vld [vmem:[%s44 + $0x90] sm:$0xff]
    %v64 = vld [vmem:[%s44 + $0x98] sm:$0xff]
    %v65 = vld [vmem:[%s44 + $0xa0] sm:$0xff]
    %v66 = vld [vmem:[%s44 + $0xa8] sm:$0xff]
    %v67 = vld [vmem:[%s44 + $0xb0] sm:$0xff]
    %v68 = vld [vmem:[%s44 + $0xb8] sm:$0xff]
    %v69 = vld [vmem:[%s44 + $0xc0] sm:$0xff]
    %v70 = vld [vmem:[%s44 + $0xc8] sm:$0xff]
    %v71 = vld [vmem:[%s44 + $0xd0] sm:$0xff]
    %v72 = vld [vmem:[%s44 + $0xd8] sm:$0xff]
    %v73 = vld [vmem:[%s44 + $0xe0] sm:$0xff]
    %v74 = vld [vmem:[%s44 + $0xe8] sm:$0xff]
    %v75 = vld [vmem:[%s44 + $0xf0] sm:$0xff]
    %v76 = vld [vmem:[%s44 + $0xf8] sm:$0xff]
    %v77 = vld [vmem:[#allocation2] sm:$0xff]
    %v78 = vld [vmem:[#allocation2 + $0x8] sm:$0xff]
    %v79 = vld [vmem:[#allocation2 + $0x10] sm:$0xff]
    %v80 = vld [vmem:[#allocation2 + $0x18] sm:$0xff]
    %v81 = vld [vmem:[#allocation2 + $0x20] sm:$0xff]
    %v82 = vld [vmem:[#allocation2 + $0x28] sm:$0xff]
    %v83 = vld [vmem:[#allocation2 + $0x30] sm:$0xff]
    %v84 = vld [vmem:[#allocation2 + $0x38] sm:$0xff]
    %v85 = vld [vmem:[#allocation2 + $0x40] sm:$0xff]
    %v86 = vld [vmem:[#allocation2 + $0x48] sm:$0xff]
    %v87 = vld [vmem:[#allocation2 + $0x50] sm:$0xff]
    %v88 = vld [vmem:[#allocation2 + $0x58] sm:$0xff]
    %v89 = vld [vmem:[#allocation2 + $0x60] sm:$0xff]
    %v90 = vld [vmem:[#allocation2 + $0x68] sm:$0xff]
    %v91 = vld [vmem:[#allocation2 + $0x70] sm:$0xff]
    %v92 = vld [vmem:[#allocation2 + $0x78] sm:$0xff]
    %v93 = vld [vmem:[#allocation2 + $0x80] sm:$0xff]
    %v94 = vld [vmem:[#allocation2 + $0x88] sm:$0xff]
    %v95 = vld [vmem:[#allocation2 + $0x90] sm:$0xff]
    %v96 = vld [vmem:[#allocation2 + $0x98] sm:$0xff]
    %v97 = vld [vmem:[#allocation2 + $0xa0] sm:$0xff]
    %v98 = vld [vmem:[#allocation2 + $0xa8] sm:$0xff]
    %v99 = vld [vmem:[#allocation2 + $0xb0] sm:$0xff]
    %v100 = vld [vmem:[#allocation2 + $0xb8] sm:$0xff]
    %v101 = vld [vmem:[#allocation2 + $0xc0] sm:$0xff]
    %v102 = vld [vmem:[#allocation2 + $0xc8] sm:$0xff]
    %v103 = vld [vmem:[#allocation2 + $0xd0] sm:$0xff]
    %v104 = vld [vmem:[#allocation2 + $0xd8] sm:$0xff]
    %v105 = vld [vmem:[#allocation2 + $0xe0] sm:$0xff]
    %v106 = vld [vmem:[#allocation2 + $0xe8] sm:$0xff]
    %v107 = vld [vmem:[#allocation2 + $0xf0] sm:$0xff]
    %v108 = vld [vmem:[#allocation2 + $0xf8] sm:$0xff]
    %109 = vmatprep.subr.mxu0 %v46
    %110 = vmatpush1.msra.mxu0 %v45
    %111 = vmatprep.subr.mxu0 %v48
    %112 = vmatpush1.msra.mxu0 %v47
    %113 = vmatprep.subr.mxu0 %v50
    %114 = vmatpush1.msra.mxu0 %v49
    %115 = vmatprep.subr.mxu0 %v52
    %116 = vmatpush1.msra.mxu0 %v51
    %117 = vmatprep.subr.mxu0 %v54
    %118 = vmatpush1.msra.mxu0 %v53
    %119 = vmatprep.subr.mxu0 %v56
    %120 = vmatpush1.msra.mxu0 %v55
    %121 = vmatprep.subr.mxu0 %v58
    %122 = vmatpush1.msra.mxu0 %v57
    %123 = vmatprep.subr.mxu0 %v60
    %124 = vmatpush1.msra.mxu0 %v59
    %125 = vmatprep.subr.mxu0 %v62
    %126 = vmatpush1.msra.mxu0 %v61
    %127 = vmatprep.subr.mxu0 %v64
    %128 = vmatpush1.msra.mxu0 %v63
    %129 = vmatprep.subr.mxu0 %v66
    %130 = vmatpush1.msra.mxu0 %v65
    %131 = vmatprep.subr.mxu0 %v68
    %132 = vmatpush1.msra.mxu0 %v67
    %133 = vmatprep.subr.mxu0 %v70
    %134 = vmatpush1.msra.mxu0 %v69
    %135 = vmatprep.subr.mxu0 %v72
    %136 = vmatpush1.msra.mxu0 %v71
    %137 = vmatprep.subr.mxu0 %v74
    %138 = vmatpush1.msra.mxu0 %v73
    %139 = vmatprep.subr.mxu0 %v76
    %140 = vmatpush1.msra.mxu0 %v75
    %141 = vmatprep.subr.mxu0 0.0
    %142 = vmatpush1.msra.mxu0 0.0
    %143 = vmatprep.subr.mxu0 0.0
    %144 = vmatpush1.msra.mxu0 0.0
    %145 = vmatprep.subr.mxu0 0.0
    %146 = vmatpush1.msra.mxu0 0.0
    %147 = vmatprep.subr.mxu0 0.0
    %148 = vmatpush1.msra.mxu0 0.0
    %149 = vmatprep.subr.mxu0 0.0
    %150 = vmatpush1.msra.mxu0 0.0
    %151 = vmatprep.subr.mxu0 0.0
    %152 = vmatpush1.msra.mxu0 0.0
    %153 = vmatprep.subr.mxu0 0.0
    %154 = vmatpush1.msra.mxu0 0.0
    %155 = vmatprep.subr.mxu0 0.0
    %156 = vmatpush1.msra.mxu0 0.0
    %157 = vmatprep.subr.mxu0 0.0
    %158 = vmatpush1.msra.mxu0 0.0
    %159 = vmatprep.subr.mxu0 0.0
    %160 = vmatpush1.msra.mxu0 0.0
    %161 = vmatprep.subr.mxu0 0.0
    %162 = vmatpush1.msra.mxu0 0.0
    %163 = vmatprep.subr.mxu0 0.0
    %164 = vmatpush1.msra.mxu0 0.0
    %165 = vmatprep.subr.mxu0 0.0
    %166 = vmatpush1.msra.mxu0 0.0
    %167 = vmatprep.subr.mxu0 0.0
    %168 = vmatpush1.msra.mxu0 0.0
    %169 = vmatprep.subr.mxu0 0.0
    %170 = vmatpush1.msra.mxu0 0.0
    %171 = vmatprep.subr.mxu0 0.0
    %172 = vmatpush1.msra.mxu0 0.0
    %173 = vmatprep.mubr.f32.mxu0 0.0
    %174 = vmatmul.mubr.f32.gmra.mrb[0].mxu0 %v77
    %v175 = vpop.f32.mrb[0].mxu0
    %v176 = vadd.f32 0.0, %v175
    %v177 = vpop.f32.mrb[0].mxu0
    %v178 = vadd.f32 0.0, %v177
    %179 = vmatprep.mubr.f32.mxu0 0.0
    %180 = vmatmul.mubr.f32.gmra.mrb[0].mxu0 %v78
    %v181 = vpop.f32.mrb[0].mxu0
    %v182 = vadd.f32 0.0, %v181
    %v183 = vpop.f32.mrb[0].mxu0
    %v184 = vadd.f32 0.0, %v183
    %185 = vmatprep.mubr.f32.mxu0 0.0
    %186 = vmatmul.mubr.f32.gmra.mrb[0].mxu0 %v79
    %v187 = vpop.f32.mrb[0].mxu0
    %v188 = vadd.f32 0.0, %v187
    %v189 = vpop.f32.mrb[0].mxu0
    %v190 = vadd.f32 0.0, %v189
    %191 = vmatprep.mubr.f32.mxu0 0.0
    %192 = vmatmul.mubr.f32.gmra.mrb[0].mxu0 %v80
    %v193 = vpop.f32.mrb[0].mxu0
    %v194 = vadd.f32 0.0, %v193
    %v195 = vpop.f32.mrb[0].mxu0
    %v196 = vadd.f32 0.0, %v195
    %197 = vmatprep.mubr.f32.mxu0 0.0
    %198 = vmatmul.mubr.f32.gmra.mrb[0].mxu0 %v81
    %v199 = vpop.f32.mrb[0].mxu0
    %v200 = vadd.f32 0.0, %v199
    %v201 = vpop.f32.mrb[0].mxu0
    %v202 = vadd.f32 0.0, %v201
    %203 = vmatprep.mubr.f32.mxu0 0.0
    %204 = vmatmul.mubr.f32.gmra.mrb[0].mxu0 %v82
    %v205 = vpop.f32.mrb[0].mxu0
    %v206 = vadd.f32 0.0, %v205
    %v207 = vpop.f32.mrb[0].mxu0
    %v208 = vadd.f32 0.0, %v207
    %209 = vmatprep.mubr.f32.mxu0 0.0
    %210 = vmatmul.mubr.f32.gmra.mrb[0].mxu0 %v83
    %v211 = vpop.f32.mrb[0].mxu0
    %v212 = vadd.f32 0.0, %v211
    %v213 = vpop.f32.mrb[0].mxu0
    %v214 = vadd.f32 0.0, %v213
    %215 = vmatprep.mubr.f32.mxu0 0.0
    %216 = vmatmul.mubr.f32.gmra.mrb[0].mxu0 %v84
    %v217 = vpop.f32.mrb[0].mxu0
    %v218 = vadd.f32 0.0, %v217
    %v219 = vpop.f32.mrb[0].mxu0
    %v220 = vadd.f32 0.0, %v219
    %221 = vmatprep.mubr.f32.mxu0 0.0
    %222 = vmatmul.mubr.f32.gmra.mrb[0].mxu0 %v85
    %v223 = vpop.f32.mrb[0].mxu0
    %v224 = vadd.f32 0.0, %v223
    %v225 = vpop.f32.mrb[0].mxu0
    %v226 = vadd.f32 0.0, %v225
    %227 = vmatprep.mubr.f32.mxu0 0.0
    %228 = vmatmul.mubr.f32.gmra.mrb[0].mxu0 %v86
    %v229 = vpop.f32.mrb[0].mxu0
    %v230 = vadd.f32 0.0, %v229
    %v231 = vpop.f32.mrb[0].mxu0
    %v232 = vadd.f32 0.0, %v231
    %233 = vmatprep.mubr.f32.mxu0 0.0
    %234 = vmatmul.mubr.f32.gmra.mrb[0].mxu0 %v87
    %v235 = vpop.f32.mrb[0].mxu0
    %v236 = vadd.f32 0.0, %v235
    %v237 = vpop.f32.mrb[0].mxu0
    %v238 = vadd.f32 0.0, %v237
    %239 = vmatprep.mubr.f32.mxu0 0.0
    %240 = vmatmul.mubr.f32.gmra.mrb[0].mxu0 %v88
    %v241 = vpop.f32.mrb[0].mxu0
    %v242 = vadd.f32 0.0, %v241
    %v243 = vpop.f32.mrb[0].mxu0
    %v244 = vadd.f32 0.0, %v243
    %245 = vmatprep.mubr.f32.mxu0 0.0
    %246 = vmatmul.mubr.f32.gmra.mrb[0].mxu0 %v89
    %v247 = vpop.f32.mrb[0].mxu0
    %v248 = vadd.f32 0.0, %v247
    %v249 = vpop.f32.mrb[0].mxu0
    %v250 = vadd.f32 0.0, %v249
    %251 = vmatprep.mubr.f32.mxu0 0.0
    %252 = vmatmul.mubr.f32.gmra.mrb[0].mxu0 %v90
    %v253 = vpop.f32.mrb[0].mxu0
    %v254 = vadd.f32 0.0, %v253
    %v255 = vpop.f32.mrb[0].mxu0
    %v256 = vadd.f32 0.0, %v255
    %257 = vmatprep.mubr.f32.mxu0 0.0
    %258 = vmatmul.mubr.f32.gmra.mrb[0].mxu0 %v91
    %v259 = vpop.f32.mrb[0].mxu0
    %v260 = vadd.f32 0.0, %v259
    %v261 = vpop.f32.mrb[0].mxu0
    %v262 = vadd.f32 0.0, %v261
    %263 = vmatprep.mubr.f32.mxu0 0.0
    %264 = vmatmul.mubr.f32.gmra.mrb[0].mxu0 %v92
    %v265 = vpop.f32.mrb[0].mxu0
    %v266 = vadd.f32 0.0, %v265
    %v267 = vpop.f32.mrb[0].mxu0
    %v268 = vadd.f32 0.0, %v267
    %269 = vmatprep.mubr.f32.mxu0 0.0
    %270 = vmatmul.mubr.f32.gmra.mrb[0].mxu0 %v93
    %v271 = vpop.f32.mrb[0].mxu0
    %v272 = vadd.f32 0.0, %v271
    %v273 = vpop.f32.mrb[0].mxu0
    %v274 = vadd.f32 0.0, %v273
    %275 = vmatprep.mubr.f32.mxu0 0.0
    %276 = vmatmul.mubr.f32.gmra.mrb[0].mxu0 %v94
    %v277 = vpop.f32.mrb[0].mxu0
    %v278 = vadd.f32 0.0, %v277
    %v279 = vpop.f32.mrb[0].mxu0
    %v280 = vadd.f32 0.0, %v279
    %281 = vmatprep.mubr.f32.mxu0 0.0
    %282 = vmatmul.mubr.f32.gmra.mrb[0].mxu0 %v95
    %v283 = vpop.f32.mrb[0].mxu0
    %v284 = vadd.f32 0.0, %v283
    %v285 = vpop.f32.mrb[0].mxu0
    %v286 = vadd.f32 0.0, %v285
    %287 = vmatprep.mubr.f32.mxu0 0.0
    %288 = vmatmul.mubr.f32.gmra.mrb[0].mxu0 %v96
    %v289 = vpop.f32.mrb[0].mxu0
    %v290 = vadd.f32 0.0, %v289
    %v291 = vpop.f32.mrb[0].mxu0
    %v292 = vadd.f32 0.0, %v291
    %293 = vmatprep.mubr.f32.mxu0 0.0
    %294 = vmatmul.mubr.f32.gmra.mrb[0].mxu0 %v97
    %v295 = vpop.f32.mrb[0].mxu0
    %v296 = vadd.f32 0.0, %v295
    %v297 = vpop.f32.mrb[0].mxu0
    %v298 = vadd.f32 0.0, %v297
    %299 = vmatprep.mubr.f32.mxu0 0.0
    %300 = vmatmul.mubr.f32.gmra.mrb[0].mxu0 %v98
    %v301 = vpop.f32.mrb[0].mxu0
    %v302 = vadd.f32 0.0, %v301
    %v303 = vpop.f32.mrb[0].mxu0
    %v304 = vadd.f32 0.0, %v303
    %305 = vmatprep.mubr.f32.mxu0 0.0
    %306 = vmatmul.mubr.f32.gmra.mrb[0].mxu0 %v99
    %v307 = vpop.f32.mrb[0].mxu0
    %v308 = vadd.f32 0.0, %v307
    %v309 = vpop.f32.mrb[0].mxu0
    %v310 = vadd.f32 0.0, %v309
    %311 = vmatprep.mubr.f32.mxu0 0.0
    %312 = vmatmul.mubr.f32.gmra.mrb[0].mxu0 %v100
    %v313 = vpop.f32.mrb[0].mxu0
    %v314 = vadd.f32 0.0, %v313
    %v315 = vpop.f32.mrb[0].mxu0
    %v316 = vadd.f32 0.0, %v315
    %317 = vmatprep.mubr.f32.mxu0 0.0
    %318 = vmatmul.mubr.f32.gmra.mrb[0].mxu0 %v101
    %v319 = vpop.f32.mrb[0].mxu0
    %v320 = vadd.f32 0.0, %v319
    %v321 = vpop.f32.mrb[0].mxu0
    %v322 = vadd.f32 0.0, %v321
    %323 = vmatprep.mubr.f32.mxu0 0.0
    %324 = vmatmul.mubr.f32.gmra.mrb[0].mxu0 %v102
    %v325 = vpop.f32.mrb[0].mxu0
    %v326 = vadd.f32 0.0, %v325
    %v327 = vpop.f32.mrb[0].mxu0
    %v328 = vadd.f32 0.0, %v327
    %329 = vmatprep.mubr.f32.mxu0 0.0
    %330 = vmatmul.mubr.f32.gmra.mrb[0].mxu0 %v103
    %v331 = vpop.f32.mrb[0].mxu0
    %v332 = vadd.f32 0.0, %v331
    %v333 = vpop.f32.mrb[0].mxu0
    %v334 = vadd.f32 0.0, %v333
    %335 = vmatprep.mubr.f32.mxu0 0.0
    %336 = vmatmul.mubr.f32.gmra.mrb[0].mxu0 %v104
    %v337 = vpop.f32.mrb[0].mxu0
    %v338 = vadd.f32 0.0, %v337
    %v339 = vpop.f32.mrb[0].mxu0
    %v340 = vadd.f32 0.0, %v339
    %341 = vmatprep.mubr.f32.mxu0 0.0
    %342 = vmatmul.mubr.f32.gmra.mrb[0].mxu0 %v105
    %v343 = vpop.f32.mrb[0].mxu0
    %v344 = vadd.f32 0.0, %v343
    %v345 = vpop.f32.mrb[0].mxu0
    %v346 = vadd.f32 0.0, %v345
    %347 = vmatprep.mubr.f32.mxu0 0.0
    %348 = vmatmul.mubr.f32.gmra.mrb[0].mxu0 %v106
    %v349 = vpop.f32.mrb[0].mxu0
    %v350 = vadd.f32 0.0, %v349
    %v351 = vpop.f32.mrb[0].mxu0
    %v352 = vadd.f32 0.0, %v351
    %353 = vmatprep.mubr.f32.mxu0 0.0
    %354 = vmatmul.mubr.f32.gmra.mrb[0].mxu0 %v107
    %v355 = vpop.f32.mrb[0].mxu0
    %v356 = vadd.f32 0.0, %v355
    %v357 = vpop.f32.mrb[0].mxu0
    %v358 = vadd.f32 0.0, %v357
    %359 = vmatprep.mubr.f32.mxu0 0.0
    %360 = vmatmul.mubr.f32.gmra.mrb[0].mxu0 %v108
    %v361 = vpop.f32.mrb[0].mxu0
    %v362 = vadd.f32 0.0, %v361
    %v363 = vpop.f32.mrb[0].mxu0
    %v364 = vadd.f32 0.0, %v363
    %365 = vdwg.mxu0
    %v366 = vxor.u32 %v176, 2147483648
    %v367 = vxor.u32 %v178, 2147483648
    %v368 = vxor.u32 %v182, 2147483648
    %v369 = vxor.u32 %v184, 2147483648
    %v370 = vxor.u32 %v188, 2147483648
    %v371 = vxor.u32 %v190, 2147483648
    %v372 = vxor.u32 %v194, 2147483648
    %v373 = vxor.u32 %v196, 2147483648
    %v374 = vxor.u32 %v200, 2147483648
    %v375 = vxor.u32 %v202, 2147483648
    %v376 = vxor.u32 %v206, 2147483648
    %v377 = vxor.u32 %v208, 2147483648
    %v378 = vxor.u32 %v212, 2147483648
    %v379 = vxor.u32 %v214, 2147483648
    %v380 = vxor.u32 %v218, 2147483648
    %v381 = vxor.u32 %v220, 2147483648
    %v382 = vxor.u32 %v224, 2147483648
    %v383 = vxor.u32 %v226, 2147483648
    %v384 = vxor.u32 %v230, 2147483648
    %v385 = vxor.u32 %v232, 2147483648
    %v386 = vxor.u32 %v236, 2147483648
    %v387 = vxor.u32 %v238, 2147483648
    %v388 = vxor.u32 %v242, 2147483648
    %v389 = vxor.u32 %v244, 2147483648
    %v390 = vxor.u32 %v248, 2147483648
    %v391 = vxor.u32 %v250, 2147483648
    %v392 = vxor.u32 %v254, 2147483648
    %v393 = vxor.u32 %v256, 2147483648
    %v394 = vxor.u32 %v260, 2147483648
    %v395 = vxor.u32 %v262, 2147483648
    %v396 = vxor.u32 %v266, 2147483648
    %v397 = vxor.u32 %v268, 2147483648
    %v398 = vxor.u32 %v272, 2147483648
    %v399 = vxor.u32 %v274, 2147483648
    %v400 = vxor.u32 %v278, 2147483648
    %v401 = vxor.u32 %v280, 2147483648
    %v402 = vxor.u32 %v284, 2147483648
    %v403 = vxor.u32 %v286, 2147483648
    %v404 = vxor.u32 %v290, 2147483648
    %v405 = vxor.u32 %v292, 2147483648
    %v406 = vxor.u32 %v296, 2147483648
    %v407 = vxor.u32 %v298, 2147483648
    %v408 = vxor.u32 %v302, 2147483648
    %v409 = vxor.u32 %v304, 2147483648
    %v410 = vxor.u32 %v308, 2147483648
    %v411 = vxor.u32 %v310, 2147483648
    %v412 = vxor.u32 %v314, 2147483648
    %v413 = vxor.u32 %v316, 2147483648
    %v414 = vxor.u32 %v320, 2147483648
    %v415 = vxor.u32 %v322, 2147483648
    %v416 = vxor.u32 %v326, 2147483648
    %v417 = vxor.u32 %v328, 2147483648
    %v418 = vxor.u32 %v332, 2147483648
    %v419 = vxor.u32 %v334, 2147483648
    %v420 = vxor.u32 %v338, 2147483648
    %v421 = vxor.u32 %v340, 2147483648
    %v422 = vxor.u32 %v344, 2147483648
    %v423 = vxor.u32 %v346, 2147483648
    %v424 = vxor.u32 %v350, 2147483648
    %v425 = vxor.u32 %v352, 2147483648
    %v426 = vxor.u32 %v356, 2147483648
    %v427 = vxor.u32 %v358, 2147483648
    %v428 = vxor.u32 %v362, 2147483648
    %v429 = vxor.u32 %v364, 2147483648
    %v430 = vmul.f32 %v366, 1.442695
    %v431 = vpow.pop %v430
    %v432 = vmul.f32 %v367, 1.442695
    %v433 = vpow.pop %v432
    %v434 = vmul.f32 %v368, 1.442695
    %v435 = vpow.pop %v434
    %v436 = vmul.f32 %v369, 1.442695
    %v437 = vpow.pop %v436
    %v438 = vmul.f32 %v370, 1.442695
    %v439 = vpow.pop %v438
    %v440 = vmul.f32 %v371, 1.442695
    %v441 = vpow.pop %v440
    %v442 = vmul.f32 %v372, 1.442695
    %v443 = vpow.pop %v442
    %v444 = vmul.f32 %v373, 1.442695
    %v445 = vpow.pop %v444
    %v446 = vmul.f32 %v374, 1.442695
    %v447 = vpow.pop %v446
    %v448 = vmul.f32 %v375, 1.442695
    %v449 = vpow.pop %v448
    %v450 = vmul.f32 %v376, 1.442695
    %v451 = vpow.pop %v450
    %v452 = vmul.f32 %v377, 1.442695
    %v453 = vpow.pop %v452
    %v454 = vmul.f32 %v378, 1.442695
    %v455 = vpow.pop %v454
    %v456 = vmul.f32 %v379, 1.442695
    %v457 = vpow.pop %v456
    %v458 = vmul.f32 %v380, 1.442695
    %v459 = vpow.pop %v458
    %v460 = vmul.f32 %v381, 1.442695
    %v461 = vpow.pop %v460
    %v462 = vmul.f32 %v382, 1.442695
    %v463 = vpow.pop %v462
    %v464 = vmul.f32 %v383, 1.442695
    %v465 = vpow.pop %v464
    %v466 = vmul.f32 %v384, 1.442695
    %v467 = vpow.pop %v466
    %v468 = vmul.f32 %v385, 1.442695
    %v469 = vpow.pop %v468
    %v470 = vmul.f32 %v386, 1.442695
    %v471 = vpow.pop %v470
    %v472 = vmul.f32 %v387, 1.442695
    %v473 = vpow.pop %v472
    %v474 = vmul.f32 %v388, 1.442695
    %v475 = vpow.pop %v474
    %v476 = vmul.f32 %v389, 1.442695
    %v477 = vpow.pop %v476
    %v478 = vmul.f32 %v390, 1.442695
    %v479 = vpow.pop %v478
    %v480 = vmul.f32 %v391, 1.442695
    %v481 = vpow.pop %v480
    %v482 = vmul.f32 %v392, 1.442695
    %v483 = vpow.pop %v482
    %v484 = vmul.f32 %v393, 1.442695
    %v485 = vpow.pop %v484
    %v486 = vmul.f32 %v394, 1.442695
    %v487 = vpow.pop %v486
    %v488 = vmul.f32 %v395, 1.442695
    %v489 = vpow.pop %v488
    %v490 = vmul.f32 %v396, 1.442695
    %v491 = vpow.pop %v490
    %v492 = vmul.f32 %v397, 1.442695
    %v493 = vpow.pop %v492
    %v494 = vmul.f32 %v398, 1.442695
    %v495 = vpow.pop %v494
    %v496 = vmul.f32 %v399, 1.442695
    %v497 = vpow.pop %v496
    %v498 = vmul.f32 %v400, 1.442695
    %v499 = vpow.pop %v498
    %v500 = vmul.f32 %v401, 1.442695
    %v501 = vpow.pop %v500
    %v502 = vmul.f32 %v402, 1.442695
    %v503 = vpow.pop %v502
    %v504 = vmul.f32 %v403, 1.442695
    %v505 = vpow.pop %v504
    %v506 = vmul.f32 %v404, 1.442695
    %v507 = vpow.pop %v506
    %v508 = vmul.f32 %v405, 1.442695
    %v509 = vpow.pop %v508
    %v510 = vmul.f32 %v406, 1.442695
    %v511 = vpow.pop %v510
    %v512 = vmul.f32 %v407, 1.442695
    %v513 = vpow.pop %v512
    %v514 = vmul.f32 %v408, 1.442695
    %v515 = vpow.pop %v514
    %v516 = vmul.f32 %v409, 1.442695
    %v517 = vpow.pop %v516
    %v518 = vmul.f32 %v410, 1.442695
    %v519 = vpow.pop %v518
    %v520 = vmul.f32 %v411, 1.442695
    %v521 = vpow.pop %v520
    %v522 = vmul.f32 %v412, 1.442695
    %v523 = vpow.pop %v522
    %v524 = vmul.f32 %v413, 1.442695
    %v525 = vpow.pop %v524
    %v526 = vmul.f32 %v414, 1.442695
    %v527 = vpow.pop %v526
    %v528 = vmul.f32 %v415, 1.442695
    %v529 = vpow.pop %v528
    %v530 = vmul.f32 %v416, 1.442695
    %v531 = vpow.pop %v530
    %v532 = vmul.f32 %v417, 1.442695
    %v533 = vpow.pop %v532
    %v534 = vmul.f32 %v418, 1.442695
    %v535 = vpow.pop %v534
    %v536 = vmul.f32 %v419, 1.442695
    %v537 = vpow.pop %v536
    %v538 = vmul.f32 %v420, 1.442695
    %v539 = vpow.pop %v538
    %v540 = vmul.f32 %v421, 1.442695
    %v541 = vpow.pop %v540
    %v542 = vmul.f32 %v422, 1.442695
    %v543 = vpow.pop %v542
    %v544 = vmul.f32 %v423, 1.442695
    %v545 = vpow.pop %v544
    %v546 = vmul.f32 %v424, 1.442695
    %v547 = vpow.pop %v546
    %v548 = vmul.f32 %v425, 1.442695
    %v549 = vpow.pop %v548
    %v550 = vmul.f32 %v426, 1.442695
    %v551 = vpow.pop %v550
    %v552 = vmul.f32 %v427, 1.442695
    %v553 = vpow.pop %v552
    %v554 = vmul.f32 %v428, 1.442695
    %v555 = vpow.pop %v554
    %v556 = vmul.f32 %v429, 1.442695
    %v557 = vpow.pop %v556
    %v558 = vadd.f32 %v431, 1.0
    %v559 = vadd.f32 %v433, 1.0
    %v560 = vadd.f32 %v435, 1.0
    %v561 = vadd.f32 %v437, 1.0
    %v562 = vadd.f32 %v439, 1.0
    %v563 = vadd.f32 %v441, 1.0
    %v564 = vadd.f32 %v443, 1.0
    %v565 = vadd.f32 %v445, 1.0
    %v566 = vadd.f32 %v447, 1.0
    %v567 = vadd.f32 %v449, 1.0
    %v568 = vadd.f32 %v451, 1.0
    %v569 = vadd.f32 %v453, 1.0
    %v570 = vadd.f32 %v455, 1.0
    %v571 = vadd.f32 %v457, 1.0
    %v572 = vadd.f32 %v459, 1.0
    %v573 = vadd.f32 %v461, 1.0
    %v574 = vadd.f32 %v463, 1.0
    %v575 = vadd.f32 %v465, 1.0
    %v576 = vadd.f32 %v467, 1.0
    %v577 = vadd.f32 %v469, 1.0
    %v578 = vadd.f32 %v471, 1.0
    %v579 = vadd.f32 %v473, 1.0
    %v580 = vadd.f32 %v475, 1.0
    %v581 = vadd.f32 %v477, 1.0
    %v582 = vadd.f32 %v479, 1.0
    %v583 = vadd.f32 %v481, 1.0
    %v584 = vadd.f32 %v483, 1.0
    %v585 = vadd.f32 %v485, 1.0
    %v586 = vadd.f32 %v487, 1.0
    %v587 = vadd.f32 %v489, 1.0
    %v588 = vadd.f32 %v491, 1.0
    %v589 = vadd.f32 %v493, 1.0
    %v590 = vadd.f32 %v495, 1.0
    %v591 = vadd.f32 %v497, 1.0
    %v592 = vadd.f32 %v499, 1.0
    %v593 = vadd.f32 %v501, 1.0
    %v594 = vadd.f32 %v503, 1.0
    %v595 = vadd.f32 %v505, 1.0
    %v596 = vadd.f32 %v507, 1.0
    %v597 = vadd.f32 %v509, 1.0
    %v598 = vadd.f32 %v511, 1.0
    %v599 = vadd.f32 %v513, 1.0
    %v600 = vadd.f32 %v515, 1.0
    %v601 = vadd.f32 %v517, 1.0
    %v602 = vadd.f32 %v519, 1.0
    %v603 = vadd.f32 %v521, 1.0
    %v604 = vadd.f32 %v523, 1.0
    %v605 = vadd.f32 %v525, 1.0
    %v606 = vadd.f32 %v527, 1.0
    %v607 = vadd.f32 %v529, 1.0
    %v608 = vadd.f32 %v531, 1.0
    %v609 = vadd.f32 %v533, 1.0
    %v610 = vadd.f32 %v535, 1.0
    %v611 = vadd.f32 %v537, 1.0
    %v612 = vadd.f32 %v539, 1.0
    %v613 = vadd.f32 %v541, 1.0
    %v614 = vadd.f32 %v543, 1.0
    %v615 = vadd.f32 %v545, 1.0
    %v616 = vadd.f32 %v547, 1.0
    %v617 = vadd.f32 %v549, 1.0
    %v618 = vadd.f32 %v551, 1.0
    %v619 = vadd.f32 %v553, 1.0
    %v620 = vadd.f32 %v555, 1.0
    %v621 = vadd.f32 %v557, 1.0
    %v622 = vrcp.pop %v558
    %v623 = vmul.f32 1.0, %v622
    %v624 = vrcp.pop %v559
    %v625 = vmul.f32 1.0, %v624
    %v626 = vrcp.pop %v560
    %v627 = vmul.f32 1.0, %v626
    %v628 = vrcp.pop %v561
    %v629 = vmul.f32 1.0, %v628
    %v630 = vrcp.pop %v562
    %v631 = vmul.f32 1.0, %v630
    %v632 = vrcp.pop %v563
    %v633 = vmul.f32 1.0, %v632
    %v634 = vrcp.pop %v564
    %v635 = vmul.f32 1.0, %v634
    %v636 = vrcp.pop %v565
    %v637 = vmul.f32 1.0, %v636
    %v638 = vrcp.pop %v566
    %v639 = vmul.f32 1.0, %v638
    %v640 = vrcp.pop %v567
    %v641 = vmul.f32 1.0, %v640
    %v642 = vrcp.pop %v568
    %v643 = vmul.f32 1.0, %v642
    %v644 = vrcp.pop %v569
    %v645 = vmul.f32 1.0, %v644
    %v646 = vrcp.pop %v570
    %v647 = vmul.f32 1.0, %v646
    %v648 = vrcp.pop %v571
    %v649 = vmul.f32 1.0, %v648
    %v650 = vrcp.pop %v572
    %v651 = vmul.f32 1.0, %v650
    %v652 = vrcp.pop %v573
    %v653 = vmul.f32 1.0, %v652
    %v654 = vrcp.pop %v574
    %v655 = vmul.f32 1.0, %v654
    %v656 = vrcp.pop %v575
    %v657 = vmul.f32 1.0, %v656
    %v658 = vrcp.pop %v576
    %v659 = vmul.f32 1.0, %v658
    %v660 = vrcp.pop %v577
    %v661 = vmul.f32 1.0, %v660
    %v662 = vrcp.pop %v578
    %v663 = vmul.f32 1.0, %v662
    %v664 = vrcp.pop %v579
    %v665 = vmul.f32 1.0, %v664
    %v666 = vrcp.pop %v580
    %v667 = vmul.f32 1.0, %v666
    %v668 = vrcp.pop %v581
    %v669 = vmul.f32 1.0, %v668
    %v670 = vrcp.pop %v582
    %v671 = vmul.f32 1.0, %v670
    %v672 = vrcp.pop %v583
    %v673 = vmul.f32 1.0, %v672
    %v674 = vrcp.pop %v584
    %v675 = vmul.f32 1.0, %v674
    %v676 = vrcp.pop %v585
    %v677 = vmul.f32 1.0, %v676
    %v678 = vrcp.pop %v586
    %v679 = vmul.f32 1.0, %v678
    %v680 = vrcp.pop %v587
    %v681 = vmul.f32 1.0, %v680
    %v682 = vrcp.pop %v588
    %v683 = vmul.f32 1.0, %v682
    %v684 = vrcp.pop %v589
    %v685 = vmul.f32 1.0, %v684
    %v686 = vrcp.pop %v590
    %v687 = vmul.f32 1.0, %v686
    %v688 = vrcp.pop %v591
    %v689 = vmul.f32 1.0, %v688
    %v690 = vrcp.pop %v592
    %v691 = vmul.f32 1.0, %v690
    %v692 = vrcp.pop %v593
    %v693 = vmul.f32 1.0, %v692
    %v694 = vrcp.pop %v594
    %v695 = vmul.f32 1.0, %v694
    %v696 = vrcp.pop %v595
    %v697 = vmul.f32 1.0, %v696
    %v698 = vrcp.pop %v596
    %v699 = vmul.f32 1.0, %v698
    %v700 = vrcp.pop %v597
    %v701 = vmul.f32 1.0, %v700
    %v702 = vrcp.pop %v598
    %v703 = vmul.f32 1.0, %v702
    %v704 = vrcp.pop %v599
    %v705 = vmul.f32 1.0, %v704
    %v706 = vrcp.pop %v600
    %v707 = vmul.f32 1.0, %v706
    %v708 = vrcp.pop %v601
    %v709 = vmul.f32 1.0, %v708
    %v710 = vrcp.pop %v602
    %v711 = vmul.f32 1.0, %v710
    %v712 = vrcp.pop %v603
    %v713 = vmul.f32 1.0, %v712
    %v714 = vrcp.pop %v604
    %v715 = vmul.f32 1.0, %v714
    %v716 = vrcp.pop %v605
    %v717 = vmul.f32 1.0, %v716
    %v718 = vrcp.pop %v606
    %v719 = vmul.f32 1.0, %v718
    %v720 = vrcp.pop %v607
    %v721 = vmul.f32 1.0, %v720
    %v722 = vrcp.pop %v608
    %v723 = vmul.f32 1.0, %v722
    %v724 = vrcp.pop %v609
    %v725 = vmul.f32 1.0, %v724
    %v726 = vrcp.pop %v610
    %v727 = vmul.f32 1.0, %v726
    %v728 = vrcp.pop %v611
    %v729 = vmul.f32 1.0, %v728
    %v730 = vrcp.pop %v612
    %v731 = vmul.f32 1.0, %v730
    %v732 = vrcp.pop %v613
    %v733 = vmul.f32 1.0, %v732
    %v734 = vrcp.pop %v614
    %v735 = vmul.f32 1.0, %v734
    %v736 = vrcp.pop %v615
    %v737 = vmul.f32 1.0, %v736
    %v738 = vrcp.pop %v616
    %v739 = vmul.f32 1.0, %v738
    %v740 = vrcp.pop %v617
    %v741 = vmul.f32 1.0, %v740
    %v742 = vrcp.pop %v618
    %v743 = vmul.f32 1.0, %v742
    %v744 = vrcp.pop %v619
    %v745 = vmul.f32 1.0, %v744
    %v746 = vrcp.pop %v620
    %v747 = vmul.f32 1.0, %v746
    %v748 = vrcp.pop %v621
    %v749 = vmul.f32 1.0, %v748
    %750 = vst [vmem:[#allocation7] sm:$0xff] %v623
    %751 = vst [vmem:[#allocation7 + $0x8] sm:$0xff] %v625
    %752 = vst [vmem:[#allocation7 + $0x10] sm:$0xff] %v627
    %753 = vst [vmem:[#allocation7 + $0x18] sm:$0xff] %v629
    %754 = vst [vmem:[#allocation7 + $0x20] sm:$0xff] %v631
    %755 = vst [vmem:[#allocation7 + $0x28] sm:$0xff] %v633
    %756 = vst [vmem:[#allocation7 + $0x30] sm:$0xff] %v635
    %757 = vst [vmem:[#allocation7 + $0x38] sm:$0xff] %v637
    %758 = vst [vmem:[#allocation7 + $0x40] sm:$0xff] %v639
    %759 = vst [vmem:[#allocation7 + $0x48] sm:$0xff] %v641
    %760 = vst [vmem:[#allocation7 + $0x50] sm:$0xff] %v643
    %761 = vst [vmem:[#allocation7 + $0x58] sm:$0xff] %v645
    %762 = vst [vmem:[#allocation7 + $0x60] sm:$0xff] %v647
    %763 = vst [vmem:[#allocation7 + $0x68] sm:$0xff] %v649
    %764 = vst [vmem:[#allocation7 + $0x70] sm:$0xff] %v651
    %765 = vst [vmem:[#allocation7 + $0x78] sm:$0xff] %v653
    %766 = vst [vmem:[#allocation7 + $0x80] sm:$0xff] %v655
    %767 = vst [vmem:[#allocation7 + $0x88] sm:$0xff] %v657
    %768 = vst [vmem:[#allocation7 + $0x90] sm:$0xff] %v659
    %769 = vst [vmem:[#allocation7 + $0x98] sm:$0xff] %v661
    %770 = vst [vmem:[#allocation7 + $0xa0] sm:$0xff] %v663
    %771 = vst [vmem:[#allocation7 + $0xa8] sm:$0xff] %v665
    %772 = vst [vmem:[#allocation7 + $0xb0] sm:$0xff] %v667
    %773 = vst [vmem:[#allocation7 + $0xb8] sm:$0xff] %v669
    %774 = vst [vmem:[#allocation7 + $0xc0] sm:$0xff] %v671
    %775 = vst [vmem:[#allocation7 + $0xc8] sm:$0xff] %v673
    %776 = vst [vmem:[#allocation7 + $0xd0] sm:$0xff] %v675
    %777 = vst [vmem:[#allocation7 + $0xd8] sm:$0xff] %v677
    %778 = vst [vmem:[#allocation7 + $0xe0] sm:$0xff] %v679
    %779 = vst [vmem:[#allocation7 + $0xe8] sm:$0xff] %v681
    %780 = vst [vmem:[#allocation7 + $0xf0] sm:$0xff] %v683
    %781 = vst [vmem:[#allocation7 + $0xf8] sm:$0xff] %v685
    %782 = vst [vmem:[#allocation7 + $0x100] sm:$0xff] %v687
    %783 = vst [vmem:[#allocation7 + $0x108] sm:$0xff] %v689
    %784 = vst [vmem:[#allocation7 + $0x110] sm:$0xff] %v691
    %785 = vst [vmem:[#allocation7 + $0x118] sm:$0xff] %v693
    %786 = vst [vmem:[#allocation7 + $0x120] sm:$0xff] %v695
    %787 = vst [vmem:[#allocation7 + $0x128] sm:$0xff] %v697
    %788 = vst [vmem:[#allocation7 + $0x130] sm:$0xff] %v699
    %789 = vst [vmem:[#allocation7 + $0x138] sm:$0xff] %v701
    %790 = vst [vmem:[#allocation7 + $0x140] sm:$0xff] %v703
    %791 = vst [vmem:[#allocation7 + $0x148] sm:$0xff] %v705
    %792 = vst [vmem:[#allocation7 + $0x150] sm:$0xff] %v707
    %793 = vst [vmem:[#allocation7 + $0x158] sm:$0xff] %v709
    %794 = vst [vmem:[#allocation7 + $0x160] sm:$0xff] %v711
    %795 = vst [vmem:[#allocation7 + $0x168] sm:$0xff] %v713
    %796 = vst [vmem:[#allocation7 + $0x170] sm:$0xff] %v715
    %797 = vst [vmem:[#allocation7 + $0x178] sm:$0xff] %v717
    %798 = vst [vmem:[#allocation7 + $0x180] sm:$0xff] %v719
    %799 = vst [vmem:[#allocation7 + $0x188] sm:$0xff] %v721
    %800 = vst [vmem:[#allocation7 + $0x190] sm:$0xff] %v723
    %801 = vst [vmem:[#allocation7 + $0x198] sm:$0xff] %v725
    %802 = vst [vmem:[#allocation7 + $0x1a0] sm:$0xff] %v727
    %803 = vst [vmem:[#allocation7 + $0x1a8] sm:$0xff] %v729
    %804 = vst [vmem:[#allocation7 + $0x1b0] sm:$0xff] %v731
    %805 = vst [vmem:[#allocation7 + $0x1b8] sm:$0xff] %v733
    %806 = vst [vmem:[#allocation7 + $0x1c0] sm:$0xff] %v735
    %807 = vst [vmem:[#allocation7 + $0x1c8] sm:$0xff] %v737
    %808 = vst [vmem:[#allocation7 + $0x1d0] sm:$0xff] %v739
    %809 = vst [vmem:[#allocation7 + $0x1d8] sm:$0xff] %v741
    %810 = vst [vmem:[#allocation7 + $0x1e0] sm:$0xff] %v743
    %811 = vst [vmem:[#allocation7 + $0x1e8] sm:$0xff] %v745
    %812 = vst [vmem:[#allocation7 + $0x1f0] sm:$0xff] %v747
    %813 = vst [vmem:[#allocation7 + $0x1f8] sm:$0xff] %v749
    // Predicated region
    $region18: #{tpu_custom_call.1} parent=1 // pred_check
      _
    $region19: #{tpu_custom_call.1} parent=1 // pred_check_branch
      %815 = sbr.rel (0) target = $region21
    $region20: #{tpu_custom_call.1} parent=1 // pred_region
      %s817 = ssub.s32 8192, 8192
      %818 = vsyncadd [#allocation4], %s817
      %s819 = sshll.u32 [#allocation7], 4
      %s820 = int_to_ptr.vmem [resolvable:$true] %s819
      %825 = dma.vmem_to_hbm [thread:$0]  %s820, 8192, %s2, [#allocation4], 256, 256, 16
    $region21: #{tpu_custom_call.1} parent=1 // pred_fallthru
      _
    // Predicated region
    $region22: #{tpu_custom_call.1} parent=1 // pred_check
      _
    $region23: #{tpu_custom_call.1} parent=1 // pred_check_branch
      %827 = sbr.rel (0) target = $region25
    $region24: #{tpu_custom_call.1} parent=1 // pred_region
      %828 = dma.done [#allocation4], 8192
    $region25: #{tpu_custom_call.1} parent=1 // pred_fallthru
      _
    %829 = vsyncpa [#allocation3], 1
    %830 = vsyncpa [#allocation6], 1
    %831 = vsyncpa [#allocation4], 1

</llo_original>
